<compile_context>
chip_gen: v7x
topology: tpu7x:2x2x1
jax: 0.10.0
libtpu: 0.0.40
codegen_flags: <defaults>
</compile_context>

<pallas_src>
import functools

import jax
import jax.numpy as jnp
from jax import lax
from jax.experimental import pallas as pl
from jax.experimental.pallas import tpu as pltpu


# ----------------------------------------------------------------------------
# Positional encoding: vectorized equivalent of the PyTorch double loop,
# evaluated only for the first `seq_len` positions used by forward().
# Odd d_model leaves the last column at 0, same as the reference loop.
# ----------------------------------------------------------------------------
def positional_encoding(seq_len: int, d_model: int):
    n = 10000.0
    half = d_model // 2
    pos = jnp.arange(seq_len, dtype=jnp.float32)[:, None]             # (S, 1)
    i = jnp.arange(half, dtype=jnp.float32)[None, :]                  # (1, D//2)
    angle = pos / (n ** (2.0 * i / d_model))                          # (S, D//2)
    pe = jnp.zeros((seq_len, d_model), dtype=jnp.float32)
    pe = pe.at[:, 0:2 * half:2].set(jnp.sin(angle))
    pe = pe.at[:, 1:2 * half:2].set(jnp.cos(angle))
    return pe


# ----------------------------------------------------------------------------
# Hardware-aware VMEM budget (v7x has 64 MiB / TensorCore, v5e/v6e 128 MiB).
# ----------------------------------------------------------------------------
def _vmem_bytes() -> int:
    try:
        kind = jax.devices()[0].device_kind.lower()
    except Exception:
        kind = ""
    if "v7" in kind:
        return 64 << 20
    if "v4" in kind or "v5" in kind or "v6" in kind:
        return 128 << 20
    return 64 << 20            # unknown generation -> conservative


def _select_tile(seq_len: int, tile_tokens: int, row_bytes: int,
                 budget_bytes: int) -> int:
    """Largest multiple of 8 that divides seq_len, capped by the requested
    tile size and by the per-generation VMEM budget."""
    if seq_len % 8 != 0:
        return seq_len                              # one full-sequence tile
    cap_rows = max(8, budget_bytes // max(1, row_bytes))
    ts = max(8, min(seq_len, tile_tokens, cap_rows))
    ts = (ts // 8) * 8
    while seq_len % ts:
        ts -= 8
    return ts


def _row_loop(n_rows: int, body):
    """Row loop: fully unrolled for small tiles, lax.fori_loop(unroll=8) for
    large tiles to avoid bundle-stream / regalloc bloat."""
    if n_rows <= 32:
        for i in range(n_rows):
            body(i)
    else:
        def fbody(i, carry):
            body(i)
            return carry
        lax.fori_loop(0, n_rows, fbody, 0, unroll=8)


# ----------------------------------------------------------------------------
# Fast path: embedding table resident in VMEM, in-VMEM row gather.
# ----------------------------------------------------------------------------
def _make_vmem_kernel(seq_len: int, tile: int, vocab: int):
    def kernel(tok_ref,   # SMEM (B*S,) int32  -- scalar-prefetched token ids
               emb_ref,   # VMEM (V, D)        -- resident table (const index_map)
               pe_ref,    # VMEM (ts, D)       -- PE rows of this seq tile
               out_ref,   # VMEM (1, ts, D)
               stage):    # VMEM (ts, D) scratch
        s = pl.program_id(0)
        b = pl.program_id(1)
        base = b * seq_len + s * tile

        def gather_row(i):
            tok = jnp.clip(tok_ref[base + i], 0, vocab - 1)
            stage[pl.ds(i, 1), :] = emb_ref[pl.ds(tok, 1), :]

        _row_loop(tile, gather_row)

        # One vectorized PE add + lane/sublane-dense store of the whole slab.
        out_ref[0] = (stage[...] + pe_ref[...]).astype(out_ref.dtype)

    return kernel


# ----------------------------------------------------------------------------
# Large-table path: per-row HBM DMAs, cross-step double-buffered.
# ----------------------------------------------------------------------------
def _make_hbm_kernel(seq_len: int, tile: int, batch: int, vocab: int,
                     n_steps: int):
    def kernel(tok_ref,   # SMEM (B*S,) int32
               emb_hbm,   # HBM  (V, D)  -- never tiled
               pe_ref,    # VMEM (ts, D)
               out_ref,   # VMEM (1, ts, D)
               stage,     # VMEM (2, ts, D) double-buffered gather staging
               sems):     # DMA semaphores (2,) -- one shared sem per slot
        s = pl.program_id(0)
        b = pl.program_id(1)
        t = s * batch + b                  # linear step index (batch innermost)
        slot = t % 2

        def fetch(tile_s, tile_b, slot_):
            base = tile_b * seq_len + tile_s * tile

            def issue_row(i):
                tok = jnp.clip(tok_ref[base + i], 0, vocab - 1)
                pltpu.make_async_copy(
                    emb_hbm.at[pl.ds(tok, 1), :],
                    stage.at[slot_, pl.ds(i, 1), :],
                    sems.at[slot_],
                ).start()

            _row_loop(tile, issue_row)

        # Prime the pipeline with the very first tile's rows.
        @pl.when(t == 0)
        def _():
            fetch(s, b, slot)

        # Issue the NEXT tile's row DMAs (SMEM scalar reads happen here, before
        # any .wait()) so the gather overlaps this step's wait + add + store.
        @pl.when(t + 1 < n_steps)
        def _():
            t1 = t + 1
            fetch(t1 // batch, t1 % batch, 1 - slot)

        # Drain the current slot: `tile` size-matched waits on the shared
        # per-slot semaphore, against the same destination slices.
        def wait_row(i):
            pltpu.make_async_copy(
                emb_hbm.at[pl.ds(0, 1), :],        # size/dst/sem match the starts
                stage.at[slot, pl.ds(i, 1), :],
                sems.at[slot],
            ).wait()

        _row_loop(tile, wait_row)

        out_ref[0] = (stage[slot] + pe_ref[...]).astype(out_ref.dtype)

    return kernel


# ----------------------------------------------------------------------------
# Wrapper (forward pass).
# ----------------------------------------------------------------------------
@functools.partial(jax.jit, static_argnames=("tile_tokens", "force_hbm_gather"))
def input_embeddings(tokens, emb_weight, *, tile_tokens: int = 256,
                     force_hbm_gather: bool = False):
    """Pallas-backed forward pass of InputEmbeddings.

    tokens:     (B, S) or (S,) integer ids
    emb_weight: (V, D) float32 embedding table (nn.Embedding.weight layout)
    returns:    (B, S, D) float32  == Embedding(tokens) + PE[:S]
    """
    if tokens.ndim != 2:                         # mirrors tokens.unsqueeze(0)
        tokens = tokens[None, :]
    tokens = tokens.astype(jnp.int32)
    B, S = tokens.shape
    V, D = emb_weight.shape
    pe = positional_encoding(S, D)

    phys_vmem = _vmem_bytes()
    vmem_limit = min(phys_vmem * 3 // 4, 96 << 20)
    budget = phys_vmem // 2                       # headroom for pipeline bufs
    table_bytes = V * D * emb_weight.dtype.itemsize
    small_table = (not force_hbm_gather) and (table_bytes <= phys_vmem // 16)

    # Per-row VMEM cost: stage (+slot) + double-buffered PE + double-buffered out.
    row_bytes = ((5 if small_table else 6) * D * 4)
    avail = budget - (table_bytes if small_table else 0)
    avail = max(avail, row_bytes * 8)
    ts = _select_tile(S, tile_tokens, row_bytes, avail)

    grid = (S // ts, B)                           # batch innermost -> PE resident
    tok_flat = tokens.reshape(-1)                 # 1-D SMEM prefetch (no 2-D pad)

    pe_spec = pl.BlockSpec((ts, D), lambda s, b, tok: (s, 0))
    out_spec = pl.BlockSpec((1, ts, D), lambda s, b, tok: (b, s, 0))

    if small_table:
        kernel = _make_vmem_kernel(S, ts, V)
        emb_spec = pl.BlockSpec((V, D), lambda s, b, tok: (0, 0))   # resident
        scratch = [pltpu.VMEM((ts, D), emb_weight.dtype)]
        dim_sem = ("parallel", "parallel")        # stateless -> megacore-safe
    else:
        kernel = _make_hbm_kernel(S, ts, B, V, (S // ts) * B)
        emb_spec = pl.BlockSpec(memory_space=pl.ANY)                # stays in HBM
        scratch = [pltpu.VMEM((2, ts, D), emb_weight.dtype),
                   pltpu.SemaphoreType.DMA((2,))]
        # Cross-step double-buffering carries DMA state between grid steps, so
        # the grid must execute sequentially (no megacore sharding here).
        dim_sem = ("arbitrary", "arbitrary")

    return pl.pallas_call(
        kernel,
        out_shape=jax.ShapeDtypeStruct((B, S, D), jnp.float32),
        grid_spec=pltpu.PrefetchScalarGridSpec(
            num_scalar_prefetch=1,                # flattened token ids -> SMEM
            grid=grid,
            in_specs=[emb_spec, pe_spec],
            out_specs=out_spec,
            scratch_shapes=scratch,
        ),
        compiler_params=pltpu.CompilerParams(
            dimension_semantics=dim_sem,
            vmem_limit_bytes=int(vmem_limit)),
    )(tok_flat, emb_weight, pe)


if __name__ == "__main__":
    # Small, deterministic example: d_model=128 (lane-dense), vocab=512,
    # batch=2, seq=16, 8 tokens per seq tile -> grid=(2, 2).
    d_model, vocab_size = 128, 512
    batch, seq = 2, 16

    key = jax.random.PRNGKey(0)
    k_emb, k_tok = jax.random.split(key)
    emb_weight = jax.random.normal(k_emb, (vocab_size, d_model), jnp.float32)
    tokens = jax.random.randint(k_tok, (batch, seq), 0, vocab_size, jnp.int32)

    # Pure-JAX reference: embedding lookup + positional-encoding broadcast.
    ref = emb_weight[tokens] + positional_encoding(seq, d_model)[None, :, :]

    # Fast path: the 256 KiB table is VMEM-resident, gather is in-VMEM.
    out_fast = jax.block_until_ready(
        input_embeddings(tokens, emb_weight, tile_tokens=8))
    assert out_fast.shape == (batch, seq, d_model)
    assert jnp.allclose(out_fast, ref, atol=1e-5, rtol=1e-5)

    # Large-table path: HBM per-row DMA gather, cross-step double-buffered.
    out_dma = jax.block_until_ready(
        input_embeddings(tokens, emb_weight, tile_tokens=8,
                         force_hbm_gather=True))
    assert jnp.allclose(out_dma, ref, atol=1e-5, rtol=1e-5)

    # 1-D (unsqueeze) path of forward().
    out1 = jax.block_until_ready(
        input_embeddings(tokens[0], emb_weight, tile_tokens=8))
    assert out1.shape == (1, seq, d_model)
    assert jnp.allclose(out1[0], ref[0], atol=1e-5, rtol=1e-5)

    print("KERNEL_OK")
</pallas_src>

<mosaic_0001>
module attributes {stable_mosaic.version = 11 : i64} {
  func.func @kernel(%arg0: i32, %arg1: i32, %arg2: memref<32xi32, #tpu.memory_space<smem>>, %arg3: memref<512x128xf32, #tpu.memory_space<vmem>>, %arg4: memref<8x128xf32, #tpu.memory_space<vmem>>, %arg5: memref<1x8x128xf32, #tpu.memory_space<vmem>>, %arg6: memref<8x128xf32, #tpu.memory_space<vmem>>) attributes {dimension_semantics = [#tpu.dimension_semantics<parallel>, #tpu.dimension_semantics<parallel>], iteration_bounds = array<i64: 2, 2>, scalar_prefetch = 1 : i64, scratch_operands = 1 : i64, tpu.core_type = #tpu.core_type<tc>, window_params = [{pipeline_mode = #tpu.pipeline_mode<synchronous>, transform_indices = @transform_0, window_bounds = array<i64: 512, 128>}, {transform_indices = @transform_1, window_bounds = array<i64: 8, 128>}, {transform_indices = @transform_2, window_bounds = array<i64: 1, 8, 128>}]} {
    %c16_i32 = arith.constant 16 : i32
    %0 = arith.muli %arg1, %c16_i32 : i32
    %c8_i32 = arith.constant 8 : i32
    %1 = arith.muli %arg0, %c8_i32 : i32
    %2 = arith.addi %0, %1 : i32
    %c0_i32 = arith.constant 0 : i32
    %3 = arith.addi %2, %c0_i32 : i32
    %4 = arith.index_cast %3 : i32 to index
    %5 = memref.load %arg2[%4] : memref<32xi32, #tpu.memory_space<smem>>
    %c0_i32_0 = arith.constant 0 : i32
    %c511_i32 = arith.constant 511 : i32
    %6 = arith.maxsi %c0_i32_0, %5 : i32
    %7 = arith.minsi %c511_i32, %6 : i32
    %8 = arith.index_cast %7 : i32 to index
    %c0 = arith.constant 0 : index
    %9 = vector.load %arg3[%8, %c0] : memref<512x128xf32, #tpu.memory_space<vmem>>, vector<1x128xf32>
    %c0_1 = arith.constant 0 : index
    %c0_2 = arith.constant 0 : index
    %10 = vector.load %arg6[%c0_1, %c0_2] : memref<8x128xf32, #tpu.memory_space<vmem>>, vector<1x128xf32>
    tpu.vector_store %arg6[%c0_1, %c0_2], %9 {strides = array<i32>} : memref<8x128xf32, #tpu.memory_space<vmem>>, vector<1x128xf32>,
    %c1_i32 = arith.constant 1 : i32
    %11 = arith.addi %2, %c1_i32 : i32
    %12 = arith.index_cast %11 : i32 to index
    %13 = memref.load %arg2[%12] : memref<32xi32, #tpu.memory_space<smem>>
    %c0_i32_3 = arith.constant 0 : i32
    %c511_i32_4 = arith.constant 511 : i32
    %14 = arith.maxsi %c0_i32_3, %13 : i32
    %15 = arith.minsi %c511_i32_4, %14 : i32
    %16 = arith.index_cast %15 : i32 to index
    %c0_5 = arith.constant 0 : index
    %17 = vector.load %arg3[%16, %c0_5] : memref<512x128xf32, #tpu.memory_space<vmem>>, vector<1x128xf32>
    %c1 = arith.constant 1 : index
    %c0_6 = arith.constant 0 : index
    %18 = vector.load %arg6[%c1, %c0_6] : memref<8x128xf32, #tpu.memory_space<vmem>>, vector<1x128xf32>
    tpu.vector_store %arg6[%c1, %c0_6], %17 {strides = array<i32>} : memref<8x128xf32, #tpu.memory_space<vmem>>, vector<1x128xf32>,
    %c2_i32 = arith.constant 2 : i32
    %19 = arith.addi %2, %c2_i32 : i32
    %20 = arith.index_cast %19 : i32 to index
    %21 = memref.load %arg2[%20] : memref<32xi32, #tpu.memory_space<smem>>
    %c0_i32_7 = arith.constant 0 : i32
    %c511_i32_8 = arith.constant 511 : i32
    %22 = arith.maxsi %c0_i32_7, %21 : i32
    %23 = arith.minsi %c511_i32_8, %22 : i32
    %24 = arith.index_cast %23 : i32 to index
    %c0_9 = arith.constant 0 : index
    %25 = vector.load %arg3[%24, %c0_9] : memref<512x128xf32, #tpu.memory_space<vmem>>, vector<1x128xf32>
    %c2 = arith.constant 2 : index
    %c0_10 = arith.constant 0 : index
    %26 = vector.load %arg6[%c2, %c0_10] : memref<8x128xf32, #tpu.memory_space<vmem>>, vector<1x128xf32>
    tpu.vector_store %arg6[%c2, %c0_10], %25 {strides = array<i32>} : memref<8x128xf32, #tpu.memory_space<vmem>>, vector<1x128xf32>,
    %c3_i32 = arith.constant 3 : i32
    %27 = arith.addi %2, %c3_i32 : i32
    %28 = arith.index_cast %27 : i32 to index
    %29 = memref.load %arg2[%28] : memref<32xi32, #tpu.memory_space<smem>>
    %c0_i32_11 = arith.constant 0 : i32
    %c511_i32_12 = arith.constant 511 : i32
    %30 = arith.maxsi %c0_i32_11, %29 : i32
    %31 = arith.minsi %c511_i32_12, %30 : i32
    %32 = arith.index_cast %31 : i32 to index
    %c0_13 = arith.constant 0 : index
    %33 = vector.load %arg3[%32, %c0_13] : memref<512x128xf32, #tpu.memory_space<vmem>>, vector<1x128xf32>
    %c3 = arith.constant 3 : index
    %c0_14 = arith.constant 0 : index
    %34 = vector.load %arg6[%c3, %c0_14] : memref<8x128xf32, #tpu.memory_space<vmem>>, vector<1x128xf32>
    tpu.vector_store %arg6[%c3, %c0_14], %33 {strides = array<i32>} : memref<8x128xf32, #tpu.memory_space<vmem>>, vector<1x128xf32>,
    %c4_i32 = arith.constant 4 : i32
    %35 = arith.addi %2, %c4_i32 : i32
    %36 = arith.index_cast %35 : i32 to index
    %37 = memref.load %arg2[%36] : memref<32xi32, #tpu.memory_space<smem>>
    %c0_i32_15 = arith.constant 0 : i32
    %c511_i32_16 = arith.constant 511 : i32
    %38 = arith.maxsi %c0_i32_15, %37 : i32
    %39 = arith.minsi %c511_i32_16, %38 : i32
    %40 = arith.index_cast %39 : i32 to index
    %c0_17 = arith.constant 0 : index
    %41 = vector.load %arg3[%40, %c0_17] : memref<512x128xf32, #tpu.memory_space<vmem>>, vector<1x128xf32>
    %c4 = arith.constant 4 : index
    %c0_18 = arith.constant 0 : index
    %42 = vector.load %arg6[%c4, %c0_18] : memref<8x128xf32, #tpu.memory_space<vmem>>, vector<1x128xf32>
    tpu.vector_store %arg6[%c4, %c0_18], %41 {strides = array<i32>} : memref<8x128xf32, #tpu.memory_space<vmem>>, vector<1x128xf32>,
    %c5_i32 = arith.constant 5 : i32
    %43 = arith.addi %2, %c5_i32 : i32
    %44 = arith.index_cast %43 : i32 to index
    %45 = memref.load %arg2[%44] : memref<32xi32, #tpu.memory_space<smem>>
    %c0_i32_19 = arith.constant 0 : i32
    %c511_i32_20 = arith.constant 511 : i32
    %46 = arith.maxsi %c0_i32_19, %45 : i32
    %47 = arith.minsi %c511_i32_20, %46 : i32
    %48 = arith.index_cast %47 : i32 to index
    %c0_21 = arith.constant 0 : index
    %49 = vector.load %arg3[%48, %c0_21] : memref<512x128xf32, #tpu.memory_space<vmem>>, vector<1x128xf32>
    %c5 = arith.constant 5 : index
    %c0_22 = arith.constant 0 : index
    %50 = vector.load %arg6[%c5, %c0_22] : memref<8x128xf32, #tpu.memory_space<vmem>>, vector<1x128xf32>
    tpu.vector_store %arg6[%c5, %c0_22], %49 {strides = array<i32>} : memref<8x128xf32, #tpu.memory_space<vmem>>, vector<1x128xf32>,
    %c6_i32 = arith.constant 6 : i32
    %51 = arith.addi %2, %c6_i32 : i32
    %52 = arith.index_cast %51 : i32 to index
    %53 = memref.load %arg2[%52] : memref<32xi32, #tpu.memory_space<smem>>
    %c0_i32_23 = arith.constant 0 : i32
    %c511_i32_24 = arith.constant 511 : i32
    %54 = arith.maxsi %c0_i32_23, %53 : i32
    %55 = arith.minsi %c511_i32_24, %54 : i32
    %56 = arith.index_cast %55 : i32 to index
    %c0_25 = arith.constant 0 : index
    %57 = vector.load %arg3[%56, %c0_25] : memref<512x128xf32, #tpu.memory_space<vmem>>, vector<1x128xf32>
    %c6 = arith.constant 6 : index
    %c0_26 = arith.constant 0 : index
    %58 = vector.load %arg6[%c6, %c0_26] : memref<8x128xf32, #tpu.memory_space<vmem>>, vector<1x128xf32>
    tpu.vector_store %arg6[%c6, %c0_26], %57 {strides = array<i32>} : memref<8x128xf32, #tpu.memory_space<vmem>>, vector<1x128xf32>,
    %c7_i32 = arith.constant 7 : i32
    %59 = arith.addi %2, %c7_i32 : i32
    %60 = arith.index_cast %59 : i32 to index
    %61 = memref.load %arg2[%60] : memref<32xi32, #tpu.memory_space<smem>>
    %c0_i32_27 = arith.constant 0 : i32
    %c511_i32_28 = arith.constant 511 : i32
    %62 = arith.maxsi %c0_i32_27, %61 : i32
    %63 = arith.minsi %c511_i32_28, %62 : i32
    %64 = arith.index_cast %63 : i32 to index
    %c0_29 = arith.constant 0 : index
    %65 = vector.load %arg3[%64, %c0_29] : memref<512x128xf32, #tpu.memory_space<vmem>>, vector<1x128xf32>
    %c7 = arith.constant 7 : index
    %c0_30 = arith.constant 0 : index
    %66 = vector.load %arg6[%c7, %c0_30] : memref<8x128xf32, #tpu.memory_space<vmem>>, vector<1x128xf32>
    tpu.vector_store %arg6[%c7, %c0_30], %65 {strides = array<i32>} : memref<8x128xf32, #tpu.memory_space<vmem>>, vector<1x128xf32>,
    %c0_31 = arith.constant 0 : index
    %c0_32 = arith.constant 0 : index
    %67 = vector.load %arg6[%c0_31, %c0_32] : memref<8x128xf32, #tpu.memory_space<vmem>>, vector<8x128xf32>
    %c0_33 = arith.constant 0 : index
    %c0_34 = arith.constant 0 : index
    %68 = vector.load %arg4[%c0_33, %c0_34] : memref<8x128xf32, #tpu.memory_space<vmem>>, vector<8x128xf32>
    %69 = arith.addf %67, %68 : vector<8x128xf32>
    %c0_35 = arith.constant 0 : index
    %c0_36 = arith.constant 0 : index
    %c0_37 = arith.constant 0 : index
    %70 = vector.load %arg5[%c0_35, %c0_36, %c0_37] : memref<1x8x128xf32, #tpu.memory_space<vmem>>, vector<1x8x128xf32>
    %71 = vector.shape_cast %70 : vector<1x8x128xf32> to vector<8x128xf32>
    %72 = vector.shape_cast %69 : vector<8x128xf32> to vector<1x8x128xf32>
    tpu.vector_store %arg5[%c0_35, %c0_36, %c0_37], %72 {strides = array<i32>} : memref<1x8x128xf32, #tpu.memory_space<vmem>>, vector<1x8x128xf32>,
    return
  }
  func.func @transform_0(%arg0: i32, %arg1: i32, %arg2: memref<32xi32, #tpu.memory_space<smem>>) -> (i32, i32) {
    %c0_i32 = arith.constant 0 : i32
    %c0_i32_0 = arith.constant 0 : i32
    %c0_i32_1 = arith.constant 0 : i32
    return %c0_i32, %c0_i32_0 : i32, i32
  }
  func.func @transform_1(%arg0: i32, %arg1: i32, %arg2: memref<32xi32, #tpu.memory_space<smem>>) -> (i32, i32) {
    %c0_i32 = arith.constant 0 : i32
    %c0_i32_0 = arith.constant 0 : i32
    return %arg0, %c0_i32 : i32, i32
  }
  func.func @transform_2(%arg0: i32, %arg1: i32, %arg2: memref<32xi32, #tpu.memory_space<smem>>) -> (i32, i32, i32) {
    %c0_i32 = arith.constant 0 : i32
    %c0_i32_0 = arith.constant 0 : i32
    return %arg1, %arg0, %c0_i32 : i32, i32, i32
  }
}

</mosaic_0001>

<llo_original>
// kernel: input_embeddings.1
$region0: #{input_embeddings.1}
  #allocation0 [shape = 'u32[]', space=smem, size = 0x4, offset = 0x4, fixed_abs, tag = 'smem constant byte address 0x4 - core index']
  #allocation1 [shape = 'u32[144,128]{1,0:T(1,128)}', space=vmem, size = 0x12000, scoped, tag = 'internal scratch']
  #allocation2 [shape = 'f32[8,128]{1,0:T(8,128)}', space=vmem, size = 0x1000, scoped, tag = 'scratch operand']
  #allocation3 [shape = 's32[1]{0}', space=sflag, size = 0x4, scoped, tag = 'scoped memory for input_embeddings.1']
  #allocation4 [shape = 'u8[512]{0}', space=smem, size = 0x200, scoped, tag = 'prefetched SMEM operand 0']
  %s0 = inlined_call_operand.vmem [shape: s32[32], index: 0, kind: input, shape index: {}]
  %s1 = inlined_call_operand.hbm [shape: f32[512,128], index: 1, kind: input, shape index: {}]
  %s2 = inlined_call_operand.vmem [shape: f32[16,128], index: 2, kind: input, shape index: {}]
  %s3 = inlined_call_operand.hbm [shape: f32[2,16,128], index: 3, kind: output, shape index: {}]
  %s4 = sld [smem:[#allocation0]]
  $region45: #{input_embeddings.1} parent=0
    _
  %s6 = ssub.s32 1, %s4
  %s7 = scalar_select 0, %s6, %s4
  %s8 = sshll.u32 %s0, 4
  %s9 = int_to_ptr.vmem [resolvable:$true] %s8
  %11 = dma.vmem_to_smem %s9, 16, [#allocation4], [#allocation3]
  %12 = dma.done [#allocation3], 16
  %13 = sfence
  $region1: #{input_embeddings.1} parent=0
    #allocation5 [shape = 'u8[262144]{0}', space=vmem, size = 0x40000, scoped, tag = 'input window, operand 1, single buffered']
    #allocation6 [shape = 's32[2]{0}', space=sflag, size = 0x8, scoped, tag = 'scoped memory for input_embeddings.1']
    #allocation7 [shape = 's32[2]{0}', space=sflag, size = 0x8, scoped, tag = 'scoped memory for input_embeddings.1']
    #allocation8 [shape = 'u8[8192]{0}', space=vmem, size = 0x2000, scoped, tag = 'output window, operand 0']
    %14 = vsyncpa [#allocation6], 0
    %15 = vsyncpa [#allocation7], 0
    %s16 = scalar_lea.sflag [#allocation7], 1
    %17 = vsyncpa %s16, 0
    loop: start=0, step=1, limit=6
    $region2: #{input_embeddings.1} parent=1 // loop_pre_header
      _
    $region3: #{input_embeddings.1} parent=1 // loop_header
      %s19 = sphi 0, %s23
      %p20 = scmp.ge.s32.totalorder %s19, 6
      %s26 = sphi 0, %s38
      %s27 = sphi 0, %s34
      %s28 = sphi 0, %s26
      %s29 = sphi 0, %s27
      %s30 = sphi 0, %s28
      %s31 = sphi 0, %s29
      %s39 = sphi 0, %s39
      %s41 = sphi 0, %s39
      %s42 = sphi 0, %s41
      %s56 = sphi 0, %s42
      %s62 = sphi 0, %s64
      %s65 = sphi 0, %s62
      %s66 = sphi 0, %s65
      %s82 = sphi 0, %s66
      %s90 = sphi 0, %s92
      %s93 = sphi 0, %s90
      %s94 = sphi 0, %s93
      %s110 = sphi 0, %s94
    $region4: #{input_embeddings.1} parent=1 // loop_header_branch
      %22 = sbr.rel (%p20) target = $region8
    $region5: #{input_embeddings.1} parent=1 // loop_body
      %s24 = ssub.s32 %s19, 1
      %s25 = ssub.s32 %s19, 2
      %s32 = sadd.s32 1, %s27
      %p33 = scmp.ge.s32.totalorder %s32, 2
      %s34 = scalar_select %p33, 0, %s32
      %s35 = sadd.s32 1, %s26
      %s36 = scalar_select %p33, %s35, %s26
      %p37 = scmp.ge.s32.totalorder %s36, 2
      %s38 = scalar_select %p37, 0, %s36
      %s40 = sadd.s32 %s39, 1
      %p43 = scmp.eq.s32.totalorder %s19, 3
      %p44 = scmp.ne.s32.totalorder %s39, %s41
      %p45 = scmp.eq.s32.totalorder %s19, 0
      %p46 = por %p44, %p45
      %p47 = scmp.ne.s32.totalorder %s39, %s41
      %p48 = scmp.eq.s32.totalorder %s24, 3
      %p49 = por %p47, %p48
      %p50 = scmp.ne.s32.totalorder %s41, %s42
      %p51 = scmp.eq.s32.totalorder %s24, 0
      %p52 = por %p50, %p51
      %p53 = scmp.ne.s32.totalorder %s41, %s42
      %p54 = scmp.eq.s32.totalorder %s25, 3
      %p55 = por %p53, %p54
      %p57 = scmp.ne.s32.totalorder %s42, %s56
      %p58 = scmp.eq.s32.totalorder %s25, 0
      %p59 = por %p57, %p58
      %s60 = ssub.s32 %s26, %s38
      %p61 = scmp.eq.s32.totalorder %s60, 0
      %s63 = sadd.s32 %s62, 1
      %s64 = scalar_select %p61, %s62, %s63
      %p67 = pneg %p61
      %p68 = scmp.eq.s32.totalorder %s19, 3
      %p69 = por %p67, %p68
      %p70 = scmp.ne.s32.totalorder %s62, %s65
      %p71 = scmp.eq.s32.totalorder %s19, 0
      %p72 = por %p70, %p71
      %p73 = scmp.ne.s32.totalorder %s62, %s65
      %p74 = scmp.eq.s32.totalorder %s24, 3
      %p75 = por %p73, %p74
      %p76 = scmp.ne.s32.totalorder %s65, %s66
      %p77 = scmp.eq.s32.totalorder %s24, 0
      %p78 = por %p76, %p77
      %p79 = scmp.ne.s32.totalorder %s65, %s66
      %p80 = scmp.eq.s32.totalorder %s25, 3
      %p81 = por %p79, %p80
      %p83 = scmp.ne.s32.totalorder %s66, %s82
      %p84 = scmp.eq.s32.totalorder %s25, 0
      %p85 = por %p83, %p84
      %s86 = ssub.s32 %s27, %s34
      %s87 = ssub.s32 %s26, %s38
      %s88 = sor.u32 %s86, %s87
      %p89 = scmp.eq.s32.totalorder %s88, 0
      %s91 = sadd.s32 %s90, 1
      %s92 = scalar_select %p89, %s90, %s91
      %p95 = pneg %p89
      %p96 = scmp.eq.s32.totalorder %s19, 3
      %p97 = por %p95, %p96
      %p98 = scmp.ne.s32.totalorder %s90, %s93
      %p99 = scmp.eq.s32.totalorder %s19, 0
      %p100 = por %p98, %p99
      %p101 = scmp.ne.s32.totalorder %s90, %s93
      %p102 = scmp.eq.s32.totalorder %s24, 3
      %p103 = por %p101, %p102
      %p104 = scmp.ne.s32.totalorder %s93, %s94
      %p105 = scmp.eq.s32.totalorder %s24, 0
      %p106 = por %p104, %p105
      %p107 = scmp.ne.s32.totalorder %s93, %s94
      %p108 = scmp.eq.s32.totalorder %s25, 3
      %p109 = por %p107, %p108
      %p111 = scmp.ne.s32.totalorder %s94, %s110
      %p112 = scmp.eq.s32.totalorder %s25, 0
      %p113 = por %p111, %p112
      %p114 = scmp.le.s32.totalorder 1, %s19
      %p115 = scmp.lt.s32.totalorder %s19, 5
      %p116 = pnand %p114, %p115
      %p117 = pneg %p116
      // Predicated region
      $region9: #{input_embeddings.1} parent=5 // pred_check
        _
      $region10: #{input_embeddings.1} parent=5 // pred_check_branch
        %119 = sbr.rel (%p116) target = $region12
      $region11: #{input_embeddings.1} parent=5 // pred_region
        %s120 = ssub.s32 %s19, 1
        // Predicated region
        $region13: #{input_embeddings.1} parent=11 // pred_check
          %p121 = pneg %p52
        $region14: #{input_embeddings.1} parent=11 // pred_check_branch
          %123 = sbr.rel (%p121) target = $region16
        $region15: #{input_embeddings.1} parent=11 // pred_region
          %s125 = ssub.s32 8192, 8192
          %126 = vsyncadd [#allocation6], %s125
          %s127 = sshll.u32 [#allocation5], 4
          %s128 = int_to_ptr.vmem [resolvable:$true] %s127
          %133 = dma.hbm_to_vmem [thread:$0]  %s1, 8192, %s128, [#allocation6], 128, 128, 8
        $region16: #{input_embeddings.1} parent=11 // pred_fallthru
          _
      $region12: #{input_embeddings.1} parent=5 // pred_fallthru
        _
      %p134 = scmp.lt.s32.totalorder %s19, 4
      // Predicated region
      $region17: #{input_embeddings.1} parent=5 // pred_check
        %p135 = pneg %p134
      $region18: #{input_embeddings.1} parent=5 // pred_check_branch
        %137 = sbr.rel (%p135) target = $region20
      $region19: #{input_embeddings.1} parent=5 // pred_region
        // Predicated region
        $region21: #{input_embeddings.1} parent=19 // pred_check
          %p138 = pneg %p72
        $region22: #{input_embeddings.1} parent=19 // pred_check_branch
          %140 = sbr.rel (%p138) target = $region24
        $region23: #{input_embeddings.1} parent=19 // pred_region
          %p141 = scmp.lt.s32.totalorder %s26, 1
          %s142 = scalar_select %p141, %s26, 1
          %s143 = smul.addr %s142, 8
          %s144 = scalar_lea.vmem %s2, %s143
        $region24: #{input_embeddings.1} parent=19 // pred_fallthru
          _
      $region20: #{input_embeddings.1} parent=5 // pred_fallthru
        _
      %p145 = scmp.le.s32.totalorder 1, %s19
      %p146 = scmp.lt.s32.totalorder %s19, 5
      %p147 = pnand %p145, %p146
      %p148 = pneg %p147
      // Predicated region
      $region25: #{input_embeddings.1} parent=5 // pred_check
        _
      $region26: #{input_embeddings.1} parent=5 // pred_check_branch
        %150 = sbr.rel (%p147) target = $region28
      $region27: #{input_embeddings.1} parent=5 // pred_region
        %s151 = ssub.s32 %s19, 1
        // Predicated region
        $region29: #{input_embeddings.1} parent=27 // pred_check
          %p152 = pneg %p52
        $region30: #{input_embeddings.1} parent=27 // pred_check_branch
          %154 = sbr.rel (%p152) target = $region32
        $region31: #{input_embeddings.1} parent=27 // pred_region
          %155 = dma.done [#allocation6], 8192
        $region32: #{input_embeddings.1} parent=27 // pred_fallthru
          _
        %p156 = pneg %p52
        %p157 = pneg %p49
        %p158 = scmp.lt.s32.totalorder %s28, 1
        %s159 = scalar_select %p158, %s28, 1
        %s160 = smul.addr %s159, 8
        %s161 = scalar_lea.vmem %s2, %s160
        %p162 = pneg %p78
        %p163 = pneg %p75
        %p164 = pneg %p106
        %p165 = pneg %p103
        %s166 = sand.u32 %s93, 1
        %s167 = scalar_lea.sflag [#allocation7], %s166
        %s168 = sand.u32 %s93, 1
        %s169 = smul.addr %s168, 8
        %s170 = scalar_lea.vmem [#allocation8], %s169
        %p171 = scmp.lt.s32.totalorder %s28, 1
        %s172 = scalar_select %p171, %s28, 1
        %s173 = smul.addr %s172, 8
        %s174 = scalar_lea.vmem %s2, %s173
        %s175 = smul.u32 %s29, 16
        %s176 = smul.u32 %s28, 8
        %s177 = sadd.s32 %s175, %s176
        %s178 = sld [smem:[#allocation4 + %s177]]
        %p179 = scmp.gt.s32.totalorder %s178, 0
        %s180 = scalar_select %p179, %s178, 0
        %p181 = scmp.lt.s32.totalorder %s180, 511
        %s182 = scalar_select %p181, %s180, 511
        %s183 = scalar_lea.vmem [#allocation5], %s182
        %v184 = vld [vmem:[%s183] sm:$0x1]
        %185 = vst [vmem:[#allocation2] sm:$0x1] %v184
        %s186 = sadd.s32 %s177, 1
        %s187 = sld [smem:[#allocation4 + %s186]]
        %p188 = scmp.gt.s32.totalorder %s187, 0
        %s189 = scalar_select %p188, %s187, 0
        %p190 = scmp.lt.s32.totalorder %s189, 511
        %s191 = scalar_select %p190, %s189, 511
        %s192 = scalar_lea.vmem [#allocation5], %s191
        %v193 = vld [vmem:[%s192] sm:$0x1]
        %194 = vst [vmem:[#allocation2 + $0x1] sm:$0x1] %v193
        %s195 = sadd.s32 %s177, 2
        %s196 = sld [smem:[#allocation4 + %s195]]
        %p197 = scmp.gt.s32.totalorder %s196, 0
        %s198 = scalar_select %p197, %s196, 0
        %p199 = scmp.lt.s32.totalorder %s198, 511
        %s200 = scalar_select %p199, %s198, 511
        %s201 = scalar_lea.vmem [#allocation5], %s200
        %v202 = vld [vmem:[%s201] sm:$0x1]
        %203 = vst [vmem:[#allocation2 + $0x2] sm:$0x1] %v202
        %s204 = sadd.s32 %s177, 3
        %s205 = sld [smem:[#allocation4 + %s204]]
        %p206 = scmp.gt.s32.totalorder %s205, 0
        %s207 = scalar_select %p206, %s205, 0
        %p208 = scmp.lt.s32.totalorder %s207, 511
        %s209 = scalar_select %p208, %s207, 511
        %s210 = scalar_lea.vmem [#allocation5], %s209
        %v211 = vld [vmem:[%s210] sm:$0x1]
        %212 = vst [vmem:[#allocation2 + $0x3] sm:$0x1] %v211
        %s213 = sadd.s32 %s177, 4
        %s214 = sld [smem:[#allocation4 + %s213]]
        %p215 = scmp.gt.s32.totalorder %s214, 0
        %s216 = scalar_select %p215, %s214, 0
        %p217 = scmp.lt.s32.totalorder %s216, 511
        %s218 = scalar_select %p217, %s216, 511
        %s219 = scalar_lea.vmem [#allocation5], %s218
        %v220 = vld [vmem:[%s219] sm:$0x1]
        %221 = vst [vmem:[#allocation2 + $0x4] sm:$0x1] %v220
        %s222 = sadd.s32 %s177, 5
        %s223 = sld [smem:[#allocation4 + %s222]]
        %p224 = scmp.gt.s32.totalorder %s223, 0
        %s225 = scalar_select %p224, %s223, 0
        %p226 = scmp.lt.s32.totalorder %s225, 511
        %s227 = scalar_select %p226, %s225, 511
        %s228 = scalar_lea.vmem [#allocation5], %s227
        %v229 = vld [vmem:[%s228] sm:$0x1]
        %230 = vst [vmem:[#allocation2 + $0x5] sm:$0x1] %v229
        %s231 = sadd.s32 %s177, 6
        %s232 = sld [smem:[#allocation4 + %s231]]
        %p233 = scmp.gt.s32.totalorder %s232, 0
        %s234 = scalar_select %p233, %s232, 0
        %p235 = scmp.lt.s32.totalorder %s234, 511
        %s236 = scalar_select %p235, %s234, 511
        %s237 = scalar_lea.vmem [#allocation5], %s236
        %v238 = vld [vmem:[%s237] sm:$0x1]
        %239 = vst [vmem:[#allocation2 + $0x6] sm:$0x1] %v238
        %s240 = sadd.s32 %s177, 7
        %s241 = sld [smem:[#allocation4 + %s240]]
        %p242 = scmp.gt.s32.totalorder %s241, 0
        %s243 = scalar_select %p242, %s241, 0
        %p244 = scmp.lt.s32.totalorder %s243, 511
        %s245 = scalar_select %p244, %s243, 511
        %s246 = scalar_lea.vmem [#allocation5], %s245
        %v247 = vld [vmem:[%s246] sm:$0x1]
        %248 = vst [vmem:[#allocation2 + $0x7] sm:$0x1] %v247
        %v249 = vld [vmem:[#allocation2] sm:$0xff]
        %v250 = vld [vmem:[%s174] sm:$0xff]
        %v251 = vadd.f32 %v249, %v250
        %252 = vst [vmem:[%s170] sm:$0xff] %v251
        %s253 = sand.u32 %s93, 1
        %s254 = scalar_lea.sflag [#allocation7], %s253
        %s255 = sand.u32 %s93, 1
        %s256 = smul.addr %s255, 8
        %s257 = scalar_lea.vmem [#allocation8], %s256
        // Predicated region
        $region33: #{input_embeddings.1} parent=27 // pred_check
          %p258 = pneg %p103
        $region34: #{input_embeddings.1} parent=27 // pred_check_branch
          %260 = sbr.rel (%p258) target = $region36
        $region35: #{input_embeddings.1} parent=27 // pred_region
          %s262 = ssub.s32 128, 128
          %263 = vsyncadd %s254, %s262
          %s264 = smul.addr %s29, 2
          %s265 = sadd.s32 %s28, %s264
          %s266 = smul.addr %s265, 128
          %s267 = scalar_lea.hbm %s3, %s266
          %s269 = sshll.u32 %s257, 4
          %s270 = int_to_ptr.vmem [resolvable:$true] %s269
          %272 = dma.vmem_to_hbm [thread:$0]  %s270, 128, %s267, %s254
        $region36: #{input_embeddings.1} parent=27 // pred_fallthru
          _
      $region28: #{input_embeddings.1} parent=5 // pred_fallthru
        _
      %p273 = scmp.le.s32.totalorder 2, %s19
      // Predicated region
      $region37: #{input_embeddings.1} parent=5 // pred_check
        %p274 = pneg %p273
      $region38: #{input_embeddings.1} parent=5 // pred_check_branch
        %276 = sbr.rel (%p274) target = $region40
      $region39: #{input_embeddings.1} parent=5 // pred_region
        %s277 = ssub.s32 %s19, 2
        // Predicated region
        $region41: #{input_embeddings.1} parent=39 // pred_check
          %p278 = pneg %p109
        $region42: #{input_embeddings.1} parent=39 // pred_check_branch
          %280 = sbr.rel (%p278) target = $region44
        $region43: #{input_embeddings.1} parent=39 // pred_region
          %s281 = sand.u32 %s94, 1
          %s282 = scalar_lea.sflag [#allocation7], %s281
          %s283 = sand.u32 %s94, 1
          %s284 = smul.addr %s283, 8
          %s285 = scalar_lea.vmem [#allocation8], %s284
          %286 = dma.done %s282, 128
        $region44: #{input_embeddings.1} parent=39 // pred_fallthru
          _
      $region40: #{input_embeddings.1} parent=5 // pred_fallthru
        _
    $region6: #{input_embeddings.1} parent=1 // loop_footer
      %s23 = sadd.s32 1, %s19
    $region7: #{input_embeddings.1} parent=1 // loop_footer_branch
      %18 = sbr.rel target = $region3
    $region8: #{input_embeddings.1} parent=1 // loop_exit
      _
    %287 = vsyncpa [#allocation6], 1
    %s288 = scalar_lea.sflag [#allocation6], 1
    %289 = vsyncpa %s288, 1
    %290 = vsyncpa [#allocation7], 1
    %s291 = scalar_lea.sflag [#allocation7], 1
    %292 = vsyncpa %s291, 1

</llo_original>
